<compile_context>
chip_gen: v6e
topology: v6e:2x2x1
jax: 0.10.0
libtpu: 0.0.40
codegen_flags: <defaults>
</compile_context>

<pallas_src>
import functools

import jax
import jax.numpy as jnp
from jax.experimental import pallas as pl
from jax.experimental.pallas import tpu as pltpu


def _ce2d_kernel(x_ref, t_ref, o_ref, *, hw, tile_hw, mask_last):
    # x_ref: (bn, C, T) logits in native dtype (classes on sublanes, pixels on lanes)
    # t_ref: (bn, 1, T) int32 targets
    # o_ref: (bn, 1, 1, 1) float32 per-image partial NLL sums for this pixel tile
    xn = x_ref[...]
    t = t_ref[...]

    # Max in the native dtype (exact for bf16/f32); logits are upcast once.
    m = jnp.max(xn, axis=1, keepdims=True).astype(jnp.float32)      # (bn, 1, T)
    x = xn.astype(jnp.float32)                                      # (bn, C, T)

    lse = jnp.log(jnp.sum(jnp.exp(x - m), axis=1, keepdims=True))   # (bn, 1, T)
    cls = jax.lax.broadcasted_iota(jnp.int32, x.shape, 1)
    x_t = jnp.sum(jnp.where(cls == t, x, 0.0), axis=1, keepdims=True)
    nll = (m + lse) - x_t                                           # (bn, 1, T)

    if mask_last:
        # Ragged last pixel tile (no host-side pad): logits/targets beyond HW
        # are garbage, so mask by LANE INDEX, not by the target value.
        j = pl.program_id(1)
        lane = jax.lax.broadcasted_iota(jnp.int32, nll.shape, 2)
        nll = jnp.where(j * tile_hw + lane < hw, nll, 0.0)

    o_ref[...] = jnp.sum(nll, axis=-1, keepdims=True).reshape(o_ref.shape)


def _pick_tiling(n, c, hw, itemsize):
    """Returns (bn, tile_hw, num_j): images per block, pixel tile, #pixel tiles."""
    # ~4 MiB native blocks for f32, ~2 MiB for bf16 (f32 temporaries double it):
    # big enough that per-step overhead is <~10% of the step's DMA, small enough
    # that double buffers + f32 temporaries fit v7x's 64 MiB VMEM.
    target = (4 << 20) if itemsize >= 4 else (2 << 20)
    per_image = c * hw * itemsize

    if per_image <= target:
        # Small-image regime: pack whole images.  Largest divisor of N whose
        # slab fits the budget -> no ragged masking on either axis.
        bn = 1
        for d in range(1, n + 1):
            if n % d == 0 and d * per_image <= target:
                bn = d
        return bn, hw, 1

    if hw <= 128:
        return 1, hw, 1

    cap = max(128, (target // (c * itemsize)) // 128 * 128)
    if cap >= hw:
        return 1, hw, 1

    # Prefer a 128-multiple divisor of HW near the cap (no ragged last tile).
    for thw in range(cap, max(cap // 2 - 1, 127), -128):
        if hw % thw == 0:
            return 1, thw, hw // thw

    # Otherwise: cdiv grid, last tile masked in-kernel.
    return 1, cap, pl.cdiv(hw, cap)


def cross_entropy_loss_2d(inputs, targets):
    """inputs: (N, C, H, W) float; targets: (N, H, W) int -> scalar mean NLL."""
    N, C, H, W = inputs.shape
    HW = H * W

    # Free reshapes only -- no pad, no transpose, logits stay in native dtype.
    x = inputs.reshape(N, C, HW)
    t = targets.reshape(N, 1, HW).astype(jnp.int32)

    itemsize = jnp.dtype(x.dtype).itemsize
    bn, tile_hw, num_j = _pick_tiling(N, C, HW, itemsize)
    mask_last = (num_j * tile_hw) != HW

    # Explicit VMEM budget: 2 double-buffered input blocks (+ targets) plus
    # ~6 full-block f32 temporaries from the upcast/exp/select chain.
    x_block = bn * C * tile_hw * itemsize
    x_block_f32 = bn * C * tile_hw * 4
    t_block = bn * tile_hw * 4
    vmem_need = 2 * (x_block + t_block) + 6 * x_block_f32 + (1 << 20)
    vmem_limit = int(min(max(vmem_need, 32 << 20), 48 << 20))

    partials = pl.pallas_call(
        functools.partial(_ce2d_kernel, hw=HW, tile_hw=tile_hw, mask_last=mask_last),
        out_shape=jax.ShapeDtypeStruct((N, num_j, 1, 1), jnp.float32),
        grid_spec=pltpu.PrefetchScalarGridSpec(
            num_scalar_prefetch=0,
            grid=(N // bn, num_j),
            in_specs=[
                pl.BlockSpec((bn, C, tile_hw), lambda i, j: (i, 0, j)),
                pl.BlockSpec((bn, 1, tile_hw), lambda i, j: (i, 0, j)),
            ],
            out_specs=pl.BlockSpec((bn, 1, 1, 1), lambda i, j: (i, j, 0, 0)),
        ),
        compiler_params=pltpu.CompilerParams(
            # No carried state: every step writes its own output block, so both
            # axes are parallel (keeps v7x megacore busy even when N == 1).
            dimension_semantics=("parallel", "parallel"),
            vmem_limit_bytes=vmem_limit,
        ),
    )(x, t)

    # TODO(synk): PyTorch NLLLoss ignore_index would also shrink the divisor;
    # this module never exercises it, so we average over all N*H*W pixels.
    return jnp.sum(partials) / jnp.float32(N * HW)


def _reference(inputs, targets):
    # Pure-JAX reference: mean_{n,h,w} -log_softmax(inputs, axis=1)[n, t, h, w]
    logp = jax.nn.log_softmax(inputs.astype(jnp.float32), axis=1)
    onehot = jax.nn.one_hot(targets, inputs.shape[1], axis=1, dtype=jnp.float32)
    return -jnp.mean(jnp.sum(logp * onehot, axis=1))


if __name__ == "__main__":
    key = jax.random.PRNGKey(0)
    k1, k2, k3, k4 = jax.random.split(key, 4)

    # Case 1: the module's implied toy shape.
    N, C, H, W = 2, 4, 16, 16
    inputs = jax.random.normal(k1, (N, C, H, W), dtype=jnp.float32)
    targets = jax.random.randint(k2, (N, H, W), 0, C, dtype=jnp.int32)
    loss = jax.block_until_ready(cross_entropy_loss_2d(inputs, targets))
    ref = _reference(inputs, targets)
    assert jnp.allclose(loss, ref, atol=1e-5, rtol=1e-5), (loss, ref)

    # Case 2: odd N / C exercises the image-packing path (bn = 3, C % 8 != 0).
    N2, C2, H2, W2 = 3, 5, 8, 16
    inputs2 = jax.random.normal(k3, (N2, C2, H2, W2), dtype=jnp.float32)
    targets2 = jax.random.randint(k4, (N2, H2, W2), 0, C2, dtype=jnp.int32)
    loss2 = jax.block_until_ready(cross_entropy_loss_2d(inputs2, targets2))
    ref2 = _reference(inputs2, targets2)
    assert jnp.allclose(loss2, ref2, atol=1e-5, rtol=1e-5), (loss2, ref2)

    print("KERNEL_OK")
</pallas_src>

<mosaic_0001>
module attributes {stable_mosaic.version = 11 : i64} {
  func.func @_ce2d_kernel(%arg0: i32, %arg1: i32, %arg2: memref<2x4x256xf32, #tpu.memory_space<vmem>>, %arg3: memref<2x1x256xi32, #tpu.memory_space<vmem>>, %arg4: memref<2x1x1x1xf32, #tpu.memory_space<vmem>>) attributes {dimension_semantics = [#tpu.dimension_semantics<parallel>, #tpu.dimension_semantics<parallel>], iteration_bounds = array<i64: 1, 1>, scalar_prefetch = 0 : i64, scratch_operands = 0 : i64, tpu.core_type = #tpu.core_type<tc>, window_params = [{transform_indices = @transform_0, window_bounds = array<i64: 2, 4, 256>}, {transform_indices = @transform_1, window_bounds = array<i64: 2, 1, 256>}, {transform_indices = @transform_2, window_bounds = array<i64: 2, 1, 1, 1>}]} {
    %c0 = arith.constant 0 : index
    %c0_0 = arith.constant 0 : index
    %c0_1 = arith.constant 0 : index
    %0 = vector.load %arg2[%c0, %c0_0, %c0_1] : memref<2x4x256xf32, #tpu.memory_space<vmem>>, vector<2x4x256xf32>
    %c0_2 = arith.constant 0 : index
    %c0_3 = arith.constant 0 : index
    %c0_4 = arith.constant 0 : index
    %1 = vector.load %arg3[%c0_2, %c0_3, %c0_4] : memref<2x1x256xi32, #tpu.memory_space<vmem>>, vector<2x1x256xi32>
    %cst = arith.constant dense<0xFF800000> : vector<2x256xf32>
    %2 = vector.multi_reduction <maximumf>, %0, %cst [1] : vector<2x4x256xf32> to vector<2x256xf32>
    %3 = vector.shape_cast %2 : vector<2x256xf32> to vector<2x1x256xf32>
    %4 = vector.broadcast %3 : vector<2x1x256xf32> to vector<2x4x256xf32>
    %5 = arith.subf %0, %4 : vector<2x4x256xf32>
    %6 = math.exp %5 : vector<2x4x256xf32>
    %cst_5 = arith.constant dense<0.000000e+00> : vector<2x256xf32>
    %7 = vector.multi_reduction <add>, %6, %cst_5 [1] : vector<2x4x256xf32> to vector<2x256xf32>
    %8 = vector.shape_cast %7 : vector<2x256xf32> to vector<2x1x256xf32>
    %9 = math.log %8 : vector<2x1x256xf32>
    %10 = tpu.iota {dimensions = array<i32: 1>} : vector<2x4x256xi32>
    %11 = vector.broadcast %1 : vector<2x1x256xi32> to vector<2x4x256xi32>
    %12 = arith.cmpi eq, %10, %11 : vector<2x4x256xi32>
    %cst_6 = arith.constant 0.000000e+00 : f32
    %13 = vector.broadcast %cst_6 : f32 to vector<2x4x256xf32>
    %14 = arith.select %12, %0, %13 : vector<2x4x256xi1>, vector<2x4x256xf32>
    %cst_7 = arith.constant dense<0.000000e+00> : vector<2x256xf32>
    %15 = vector.multi_reduction <add>, %14, %cst_7 [1] : vector<2x4x256xf32> to vector<2x256xf32>
    %16 = vector.shape_cast %15 : vector<2x256xf32> to vector<2x1x256xf32>
    %17 = arith.addf %3, %9 : vector<2x1x256xf32>
    %18 = arith.subf %17, %16 : vector<2x1x256xf32>
    %cst_8 = arith.constant dense<0.000000e+00> : vector<2x1xf32>
    %19 = vector.multi_reduction <add>, %18, %cst_8 [2] : vector<2x1x256xf32> to vector<2x1xf32>
    %20 = vector.shape_cast %19 : vector<2x1xf32> to vector<2x1x1xf32>
    %21 = vector.shape_cast %20 : vector<2x1x1xf32> to vector<2x1x1x1xf32>
    %c0_9 = arith.constant 0 : index
    %c0_10 = arith.constant 0 : index
    %c0_11 = arith.constant 0 : index
    %c0_12 = arith.constant 0 : index
    %22 = vector.load %arg4[%c0_9, %c0_10, %c0_11, %c0_12] : memref<2x1x1x1xf32, #tpu.memory_space<vmem>>, vector<2x1x1x1xf32>
    tpu.vector_store %arg4[%c0_9, %c0_10, %c0_11, %c0_12], %21 {strides = array<i32>} : memref<2x1x1x1xf32, #tpu.memory_space<vmem>>, vector<2x1x1x1xf32>,
    return
  }
  func.func @transform_0(%arg0: i32, %arg1: i32) -> (i32, i32, i32) {
    %c0_i32 = arith.constant 0 : i32
    %c0_i32_0 = arith.constant 0 : i32
    return %arg0, %c0_i32, %arg1 : i32, i32, i32
  }
  func.func @transform_1(%arg0: i32, %arg1: i32) -> (i32, i32, i32) {
    %c0_i32 = arith.constant 0 : i32
    %c0_i32_0 = arith.constant 0 : i32
    return %arg0, %c0_i32, %arg1 : i32, i32, i32
  }
  func.func @transform_2(%arg0: i32, %arg1: i32) -> (i32, i32, i32, i32) {
    %c0_i32 = arith.constant 0 : i32
    %c0_i32_0 = arith.constant 0 : i32
    %c0_i32_1 = arith.constant 0 : i32
    return %arg0, %arg1, %c0_i32, %c0_i32_0 : i32, i32, i32, i32
  }
}

</mosaic_0001>

<llo_original>
// kernel: tpu_custom_call.1
$region0: #{tpu_custom_call.1}
  #allocation0 [shape = 'u32[]', space=smem, size = 0x4, offset = 0x4, fixed_abs, tag = 'smem constant byte address 0x4 - core index']
  #allocation1 [shape = 'u32[144,128]{1,0:T(1,128)}', space=vmem, size = 0x12000, scoped, tag = 'internal scratch']
  %s0 = inlined_call_operand.hbm [shape: f32[2,4,256], index: 0, kind: input, shape index: {}]
  %s1 = inlined_call_operand.hbm [shape: s32[2,1,256], index: 1, kind: input, shape index: {}]
  %s2 = inlined_call_operand.vmem [shape: f32[2,1,1,1], index: 2, kind: output, shape index: {}]
  %s3 = sld [smem:[#allocation0]]
  $region26: #{tpu_custom_call.1} parent=0
    _
  %s5 = ssub.s32 1, %s3
  %s6 = scalar_select 0, %s5, %s3
  $region1: #{tpu_custom_call.1} parent=0
    #allocation2 [shape = 'u8[8192]{0}', space=vmem, size = 0x2000, scoped, tag = 'input window, operand 0, single buffered']
    #allocation3 [shape = 's32[1]{0}', space=sflag, size = 0x4, scoped, tag = 'scoped memory for tpu_custom_call.1']
    #allocation4 [shape = 'u8[2048]{0}', space=vmem, size = 0x800, scoped, tag = 'input window, operand 1, single buffered']
    #allocation5 [shape = 's32[1]{0}', space=sflag, size = 0x4, scoped, tag = 'scoped memory for tpu_custom_call.1']
    %7 = vsyncpa [#allocation3], 0
    %8 = vsyncpa [#allocation5], 0
    // Predicated region
    $region2: #{tpu_custom_call.1} parent=1 // pred_check
      _
    $region3: #{tpu_custom_call.1} parent=1 // pred_check_branch
      %10 = sbr.rel (0) target = $region5
    $region4: #{tpu_custom_call.1} parent=1 // pred_region
      %s12 = ssub.s32 256, 256
      %13 = vsyncadd [#allocation3], %s12
      %s14 = sshll.u32 [#allocation2], 4
      %s15 = int_to_ptr.vmem [resolvable:$true] %s14
      %20 = dma.hbm_to_vmem [thread:$0]  %s0, 256, %s15, [#allocation3], 128, 128, 8
    $region5: #{tpu_custom_call.1} parent=1 // pred_fallthru
      _
    // Predicated region
    $region6: #{tpu_custom_call.1} parent=1 // pred_check
      _
    $region7: #{tpu_custom_call.1} parent=1 // pred_check_branch
      %22 = sbr.rel (0) target = $region9
    $region8: #{tpu_custom_call.1} parent=1 // pred_region
      %s24 = ssub.s32 64, 64
      %25 = vsyncadd [#allocation5], %s24
      %s26 = sshll.u32 [#allocation4], 4
      %s27 = int_to_ptr.vmem [resolvable:$true] %s26
      %32 = dma.hbm_to_vmem [thread:$0]  %s1, 64, %s27, [#allocation5], 32, 32, 2
    $region9: #{tpu_custom_call.1} parent=1 // pred_fallthru
      _
    // Predicated region
    $region10: #{tpu_custom_call.1} parent=1 // pred_check
      _
    $region11: #{tpu_custom_call.1} parent=1 // pred_check_branch
      %34 = sbr.rel (0) target = $region13
    $region12: #{tpu_custom_call.1} parent=1 // pred_region
      %35 = dma.done [#allocation3], 256
    $region13: #{tpu_custom_call.1} parent=1 // pred_fallthru
      _
    // Predicated region
    $region14: #{tpu_custom_call.1} parent=1 // pred_check
      _
    $region15: #{tpu_custom_call.1} parent=1 // pred_check_branch
      %37 = sbr.rel (0) target = $region17
    $region16: #{tpu_custom_call.1} parent=1 // pred_region
      %38 = dma.done [#allocation5], 64
    $region17: #{tpu_custom_call.1} parent=1 // pred_fallthru
      _
    %v39 = vld [vmem:[#allocation2] sm:$0xff]
    %v40 = vld [vmem:[#allocation2 + $0x8] sm:$0xff]
    %v41 = vld [vmem:[#allocation4] sm:$0x3]
    %v42 = vld [vmem:[#allocation4 + $0x2] sm:$0x3]
    %v45 = vcombine.high %v39, %v39
    %v46 = vcombine.high %v40, %v40
    %vm49 = vcmask 1043456
    %v50 = vsel %vm49, %v39, -inf
    %v51 = vrot.slane %v50, 4
    %v52 = vmax.f32 %v50, %v51
    %v53 = vrot.slane %v52, 2
    %v54 = vmax.f32 %v52, %v53
    %v55 = vrot.slane %v54, 1
    %v56 = vmax.f32 %v54, %v55
    %v57 = vsel %vm49, %v45, -inf
    %v58 = vrot.slane %v57, 4
    %v59 = vmax.f32 %v57, %v58
    %v60 = vrot.slane %v59, 2
    %v61 = vmax.f32 %v59, %v60
    %v62 = vrot.slane %v61, 1
    %v63 = vmax.f32 %v61, %v62
    %v64 = vsel %vm49, %v40, -inf
    %v65 = vrot.slane %v64, 4
    %v66 = vmax.f32 %v64, %v65
    %v67 = vrot.slane %v66, 2
    %v68 = vmax.f32 %v66, %v67
    %v69 = vrot.slane %v68, 1
    %v70 = vmax.f32 %v68, %v69
    %v71 = vsel %vm49, %v46, -inf
    %v72 = vrot.slane %v71, 4
    %v73 = vmax.f32 %v71, %v72
    %v74 = vrot.slane %v73, 2
    %v75 = vmax.f32 %v73, %v74
    %v76 = vrot.slane %v75, 1
    %v77 = vmax.f32 %v75, %v76
    %v82 = vcombine.low %v56, %v63
    %v83 = vcombine.low %v70, %v77
    %v86 = vsub.f32 %v39, %v82
    %v87 = vsub.f32 %v40, %v83
    %v88 = vmul.f32 %v86, 1.442695
    %v89 = vpow.pop %v88
    %v90 = vmul.f32 %v87, 1.442695
    %v91 = vpow.pop %v90
    %v94 = vcombine.high %v89, %v89
    %v95 = vcombine.high %v91, %v91
    %v98 = vsel %vm49, %v89, 0.0
    %v99 = vrot.slane %v98, 4
    %v100 = vadd.f32 %v98, %v99
    %v101 = vrot.slane %v100, 2
    %v102 = vadd.f32 %v100, %v101
    %v103 = vrot.slane %v102, 1
    %v104 = vadd.f32 %v102, %v103
    %v105 = vsel %vm49, %v94, 0.0
    %v106 = vrot.slane %v105, 4
    %v107 = vadd.f32 %v105, %v106
    %v108 = vrot.slane %v107, 2
    %v109 = vadd.f32 %v107, %v108
    %v110 = vrot.slane %v109, 1
    %v111 = vadd.f32 %v109, %v110
    %v112 = vsel %vm49, %v91, 0.0
    %v113 = vrot.slane %v112, 4
    %v114 = vadd.f32 %v112, %v113
    %v115 = vrot.slane %v114, 2
    %v116 = vadd.f32 %v114, %v115
    %v117 = vrot.slane %v116, 1
    %v118 = vadd.f32 %v116, %v117
    %v119 = vsel %vm49, %v95, 0.0
    %v120 = vrot.slane %v119, 4
    %v121 = vadd.f32 %v119, %v120
    %v122 = vrot.slane %v121, 2
    %v123 = vadd.f32 %v121, %v122
    %v124 = vrot.slane %v123, 1
    %v125 = vadd.f32 %v123, %v124
    %v126 = vlog2.pop %v104
    %v127 = vmul.f32 %v126, 0.6931472
    %v128 = vlog2.pop %v111
    %v129 = vmul.f32 %v128, 0.6931472
    %v130 = vlog2.pop %v118
    %v131 = vmul.f32 %v130, 0.6931472
    %v132 = vlog2.pop %v125
    %v133 = vmul.f32 %v132, 0.6931472
    %v134 = vlaneseq
    %v135 = vshrl.u32 %v134, 7
    %v136 = vlaneseq
    %v137 = vshrl.u32 %v136, 7
    %v138 = vsub.s32 0, %v137
    %v139 = vrot.slane %v41, %v138
    %v140 = vlaneseq
    %v141 = vshrl.u32 %v140, 7
    %v142 = vsub.s32 1, %v141
    %v143 = vrot.slane %v41, %v142
    %v144 = vlaneseq
    %v145 = vshrl.u32 %v144, 7
    %v146 = vsub.s32 0, %v145
    %v147 = vrot.slane %v42, %v146
    %v148 = vlaneseq
    %v149 = vshrl.u32 %v148, 7
    %v150 = vsub.s32 1, %v149
    %v151 = vrot.slane %v42, %v150
    %vm152 = vcmp.eq.s32.totalorder %v135, %v139
    %vm153 = vcmp.eq.s32.totalorder %v135, %v143
    %vm154 = vcmp.eq.s32.totalorder %v135, %v147
    %vm155 = vcmp.eq.s32.totalorder %v135, %v151
    %v156 = vsel %vm152, %v39, 0.0
    %v157 = vsel %vm153, %v45, 0.0
    %v158 = vsel %vm154, %v40, 0.0
    %v159 = vsel %vm155, %v46, 0.0
    %v160 = vsel %vm49, %v156, 0.0
    %v161 = vrot.slane %v160, 4
    %v162 = vadd.f32 %v160, %v161
    %v163 = vrot.slane %v162, 2
    %v164 = vadd.f32 %v162, %v163
    %v165 = vrot.slane %v164, 1
    %v166 = vadd.f32 %v164, %v165
    %v167 = vsel %vm49, %v157, 0.0
    %v168 = vrot.slane %v167, 4
    %v169 = vadd.f32 %v167, %v168
    %v170 = vrot.slane %v169, 2
    %v171 = vadd.f32 %v169, %v170
    %v172 = vrot.slane %v171, 1
    %v173 = vadd.f32 %v171, %v172
    %v174 = vsel %vm49, %v158, 0.0
    %v175 = vrot.slane %v174, 4
    %v176 = vadd.f32 %v174, %v175
    %v177 = vrot.slane %v176, 2
    %v178 = vadd.f32 %v176, %v177
    %v179 = vrot.slane %v178, 1
    %v180 = vadd.f32 %v178, %v179
    %v181 = vsel %vm49, %v159, 0.0
    %v182 = vrot.slane %v181, 4
    %v183 = vadd.f32 %v181, %v182
    %v184 = vrot.slane %v183, 2
    %v185 = vadd.f32 %v183, %v184
    %v186 = vrot.slane %v185, 1
    %v187 = vadd.f32 %v185, %v186
    %v188 = vadd.f32 %v56, %v127
    %v189 = vadd.f32 %v63, %v129
    %v190 = vadd.f32 %v70, %v131
    %v191 = vadd.f32 %v77, %v133
    %v192 = vsub.f32 %v188, %v166
    %v193 = vsub.f32 %v189, %v173
    %v194 = vsub.f32 %v190, %v180
    %v195 = vsub.f32 %v191, %v187
    %v196 = vadd.f32 %v192, %v193
    %197 = vadd.xlane.f32.xlu0 %v196
    %v198 = vpop.xlane.xlu0 %197
    %v199 = vadd.f32 %v194, %v195
    %200 = vadd.xlane.f32.xlu0 %v199
    %v201 = vpop.xlane.xlu0 %200
    %vm202 = vcmask 0
    %203 = vst.msk [vmem:[%s2] sm:$0x1] %vm202, %v198
    %204 = vst.msk [vmem:[%s2 + $0x1] sm:$0x1] %vm202, %v201
    // Predicated region
    $region18: #{tpu_custom_call.1} parent=1 // pred_check
      _
    $region19: #{tpu_custom_call.1} parent=1 // pred_check_branch
      %206 = sbr.rel (0) target = $region21
    $region20: #{tpu_custom_call.1} parent=1 // pred_region
      _
    $region21: #{tpu_custom_call.1} parent=1 // pred_fallthru
      _
    // Predicated region
    $region22: #{tpu_custom_call.1} parent=1 // pred_check
      _
    $region23: #{tpu_custom_call.1} parent=1 // pred_check_branch
      %208 = sbr.rel (0) target = $region25
    $region24: #{tpu_custom_call.1} parent=1 // pred_region
      _
    $region25: #{tpu_custom_call.1} parent=1 // pred_fallthru
      _
    %209 = vsyncpa [#allocation3], 1
    %210 = vsyncpa [#allocation5], 1

</llo_original>
